<compile_context>
chip_gen: v7x
topology: tpu7x:2x2x1
jax: 0.10.0
libtpu: 0.0.40
codegen_flags: <defaults>
</compile_context>

<pallas_src>
import functools

import jax
import jax.numpy as jnp
from jax.experimental import pallas as pl
from jax.experimental.pallas import tpu as pltpu


def _round_up(x, m):
    return (x + m - 1) // m * m


# ---------------------------------------------------------------------------
# Kernel
# ---------------------------------------------------------------------------
def _fused_critic_kernel(n_fused_hidden,
                         s_ref, a_ref,
                         w0s_ref, w0a_ref,
                         wh_ref, bh_ref,
                         wq_ref, bq_ref,
                         out_ref):
    """Fused twin-critic MLP (both Q paths run as one block-diagonal chain).

    s_ref  : [TB, S]        states tile
    a_ref  : [TB, A]        actions tile
    w0s_ref: [S, H2]        layer-0 weights, state rows   (q1 | q2 fused on cols)
    w0a_ref: [A, H2]        layer-0 weights, action rows
    wh_ref : [L, H2, H2]    block-diagonal fused hidden layers 1..L
    bh_ref : [L+1, H2]      biases for ReLU layers 0..L (zero-padded)
    wq_ref : [H2, 2]        fused head (col 0 = q1, col 1 = q2)
    bq_ref : [1, 2]
    out_ref: [TB, 2]        lane-dense output, q1 = col 0, q2 = col 1
    """
    s = s_ref[...]
    a = a_ref[...]
    bh = bh_ref[...]

    # Layer 0: x @ W0 == s @ W0[:S] + a @ W0[S:]  (concat avoided)
    h = (jnp.dot(s, w0s_ref[...], preferred_element_type=jnp.float32)
         + jnp.dot(a, w0a_ref[...], preferred_element_type=jnp.float32)
         + bh[0:1, :])
    h = jnp.maximum(h, 0.0)

    # Fused (block-diagonal) hidden ReLU layers 1..L
    for li in range(n_fused_hidden):
        h = (jnp.dot(h, wh_ref[li], preferred_element_type=jnp.float32)
             + bh[li + 1:li + 2, :])
        h = jnp.maximum(h, 0.0)

    # Fused head: [TB, H2] @ [H2, 2] -> [TB, 2]
    out_ref[...] = (jnp.dot(h, wq_ref[...], preferred_element_type=jnp.float32)
                    + bq_ref[...])


# ---------------------------------------------------------------------------
# Parameter fusion (host-side, done once): build block-diagonal twin weights
# ---------------------------------------------------------------------------
def _fuse_twin_params(q1_params, q2_params, state_dim, action_dim):
    """q*_params: list of (W [in, out], b [out]) in forward order; last = head."""
    relu_q1, head_q1 = q1_params[:-1], q1_params[-1]
    relu_q2, head_q2 = q2_params[:-1], q2_params[-1]
    n_relu = len(relu_q1)
    widths = [w.shape[1] for (w, _) in relu_q1]          # per-path output widths
    half = _round_up(max(widths), 8)                     # aligned per-path width
    H2 = 2 * half                                        # fused width

    f32 = jnp.float32

    # Layer 0 (split into state / action rows, fused along output columns).
    w0_q1, _ = relu_q1[0]
    w0_q2, _ = relu_q2[0]
    d0 = widths[0]
    w0s = jnp.zeros((state_dim, H2), f32)
    w0s = w0s.at[:, :d0].set(w0_q1[:state_dim].astype(f32))
    w0s = w0s.at[:, half:half + d0].set(w0_q2[:state_dim].astype(f32))
    w0a = jnp.zeros((action_dim, H2), f32)
    w0a = w0a.at[:, :d0].set(w0_q1[state_dim:].astype(f32))
    w0a = w0a.at[:, half:half + d0].set(w0_q2[state_dim:].astype(f32))

    # Hidden layers 1..L as one block-diagonal slab.
    n_fh = n_relu - 1
    wh = jnp.zeros((n_fh, H2, H2), f32)
    for li in range(1, n_relu):
        w1, _ = relu_q1[li]
        w2, _ = relu_q2[li]
        din, dout = w1.shape
        wh = wh.at[li - 1, :din, :dout].set(w1.astype(f32))
        wh = wh.at[li - 1, half:half + din, half:half + dout].set(w2.astype(f32))

    # Biases for all ReLU layers (zero-padded; ReLU(0)=0 keeps padding inert).
    bh = jnp.zeros((n_relu, H2), f32)
    for li in range(n_relu):
        b1 = relu_q1[li][1]
        b2 = relu_q2[li][1]
        d = b1.shape[0]
        bh = bh.at[li, :d].set(b1.astype(f32))
        bh = bh.at[li, half:half + d].set(b2.astype(f32))

    # Fused head: column 0 = q1, column 1 = q2.
    wq1, bq1 = head_q1
    wq2, bq2 = head_q2
    d_last = wq1.shape[0]
    wq = jnp.zeros((H2, 2), f32)
    wq = wq.at[:d_last, 0:1].set(wq1.astype(f32))
    wq = wq.at[half:half + d_last, 1:2].set(wq2.astype(f32))
    bq = jnp.zeros((1, 2), f32)
    bq = bq.at[0, 0].set(bq1[0].astype(f32))
    bq = bq.at[0, 1].set(bq2[0].astype(f32))

    return w0s, w0a, wh, bh, wq, bq, n_fh, H2


# ---------------------------------------------------------------------------
# Wrapper
# ---------------------------------------------------------------------------
def critic_forward(states, actions, q1_params, q2_params):
    states = states.astype(jnp.float32)
    actions = actions.astype(jnp.float32)
    batch, state_dim = states.shape
    action_dim = actions.shape[1]

    w0s, w0a, wh, bh, wq, bq, n_fh, H2 = _fuse_twin_params(
        q1_params, q2_params, state_dim, action_dim)

    # Batch tiling: multiple of 8 sublanes, capped so tiles pipeline nicely.
    TB = min(512, _round_up(batch, 8))
    B_pad = _round_up(batch, TB)
    if B_pad != batch:
        pad = B_pad - batch
        states = jnp.pad(states, ((0, pad), (0, 0)))
        actions = jnp.pad(actions, ((0, pad), (0, 0)))

    grid = (B_pad // TB,)
    kernel = functools.partial(_fused_critic_kernel, n_fh)

    q_both = pl.pallas_call(
        kernel,
        out_shape=jax.ShapeDtypeStruct((B_pad, 2), jnp.float32),
        grid=grid,
        in_specs=[
            pl.BlockSpec((TB, state_dim), lambda i: (i, 0)),       # states (tiled)
            pl.BlockSpec((TB, action_dim), lambda i: (i, 0)),      # actions (tiled)
            pl.BlockSpec((state_dim, H2), lambda i: (0, 0)),       # w0s (resident)
            pl.BlockSpec((action_dim, H2), lambda i: (0, 0)),      # w0a (resident)
            pl.BlockSpec((n_fh, H2, H2), lambda i: (0, 0, 0)),     # wh  (resident)
            pl.BlockSpec((n_fh + 1, H2), lambda i: (0, 0)),        # bh  (resident)
            pl.BlockSpec((H2, 2), lambda i: (0, 0)),               # wq  (resident)
            pl.BlockSpec((1, 2), lambda i: (0, 0)),                # bq  (resident)
        ],
        out_specs=pl.BlockSpec((TB, 2), lambda i: (i, 0)),
        compiler_params=pltpu.CompilerParams(
            dimension_semantics=("parallel",),        # shard batch across TCs (v7x)
            vmem_limit_bytes=32 * 1024 * 1024,        # well under v7x's 64 MiB VMEM
        ),
    )(states, actions, w0s, w0a, wh, bh, wq, bq)

    q1 = q_both[:batch, 0:1]
    q2 = q_both[:batch, 1:2]
    return q1, q2


# ---------------------------------------------------------------------------
# Init & reference (mirror the PyTorch module exactly)
# ---------------------------------------------------------------------------
def init_critic_params(key, input_dim, action_dim, hidden_layer_dims):
    """Deterministic init mimicking nn.Linear's U(-1/sqrt(fan_in), 1/sqrt(fan_in))."""
    def linear(key, fan_in, fan_out):
        kw, kb = jax.random.split(key)
        bound = 1.0 / jnp.sqrt(jnp.float32(fan_in))
        w = jax.random.uniform(kw, (fan_in, fan_out), jnp.float32, -bound, bound)
        b = jax.random.uniform(kb, (fan_out,), jnp.float32, -bound, bound)
        return w, b

    dims = [input_dim + action_dim] + list(hidden_layer_dims) + [action_dim]

    def make_path(key):
        params = []
        for i in range(len(dims) - 1):
            key, sub = jax.random.split(key)
            params.append(linear(sub, dims[i], dims[i + 1]))
        key, sub = jax.random.split(key)
        params.append(linear(sub, action_dim, 1))   # self.q1 / self.q2 head
        return params

    k1, k2 = jax.random.split(key)
    return make_path(k1), make_path(k2)


def _reference_forward(states, actions, q1_params, q2_params):
    """Pure-JAX reference mirroring the PyTorch forward exactly."""
    x = jnp.concatenate([states, actions], axis=1)

    def path(params):
        a = x
        for w, b in params[:-1]:
            a = jnp.maximum(a @ w + b, 0.0)   # ReLU on every q*_layers layer
        wq, bq = params[-1]
        return a @ wq + bq                    # head, no activation

    return path(q1_params), path(q2_params)


if __name__ == "__main__":
    # Module config: input_shape=(16,), output_shape=(4,), hidden_layer_dims=[32, 32]
    batch, state_dim, action_dim = 2, 16, 4
    hidden_layer_dims = [32, 32]

    key = jax.random.PRNGKey(0)
    k_s, k_a, k_p = jax.random.split(key, 3)
    states = jax.random.normal(k_s, (batch, state_dim), dtype=jnp.float32)
    actions = jax.random.normal(k_a, (batch, action_dim), dtype=jnp.float32)

    q1_params, q2_params = init_critic_params(k_p, state_dim, action_dim,
                                              hidden_layer_dims)

    q1, q2 = critic_forward(states, actions, q1_params, q2_params)
    q1, q2 = jax.block_until_ready((q1, q2))

    q1_ref, q2_ref = _reference_forward(states, actions, q1_params, q2_params)
    assert q1.shape == (batch, 1) and q2.shape == (batch, 1)
    assert jnp.allclose(q1, q1_ref, atol=1e-5, rtol=1e-5)
    assert jnp.allclose(q2, q2_ref, atol=1e-5, rtol=1e-5)

    print("KERNEL_OK")
</pallas_src>

<mosaic_0001>
module attributes {stable_mosaic.version = 11 : i64} {
  func.func @_fused_critic_kernel(%arg0: i32, %arg1: memref<8x16xf32, #tpu.memory_space<vmem>>, %arg2: memref<8x4xf32, #tpu.memory_space<vmem>>, %arg3: memref<16x64xf32, #tpu.memory_space<vmem>>, %arg4: memref<4x64xf32, #tpu.memory_space<vmem>>, %arg5: memref<2x64x64xf32, #tpu.memory_space<vmem>>, %arg6: memref<3x64xf32, #tpu.memory_space<vmem>>, %arg7: memref<64x2xf32, #tpu.memory_space<vmem>>, %arg8: memref<1x2xf32, #tpu.memory_space<vmem>>, %arg9: memref<8x2xf32, #tpu.memory_space<vmem>>) attributes {dimension_semantics = [#tpu.dimension_semantics<parallel>], iteration_bounds = array<i64: 1>, scalar_prefetch = 0 : i64, scratch_operands = 0 : i64, tpu.core_type = #tpu.core_type<tc>, window_params = [{transform_indices = @transform_0, window_bounds = array<i64: 8, 16>}, {transform_indices = @transform_1, window_bounds = array<i64: 8, 4>}, {pipeline_mode = #tpu.pipeline_mode<synchronous>, transform_indices = @transform_2, window_bounds = array<i64: 16, 64>}, {pipeline_mode = #tpu.pipeline_mode<synchronous>, transform_indices = @transform_3, window_bounds = array<i64: 4, 64>}, {pipeline_mode = #tpu.pipeline_mode<synchronous>, transform_indices = @transform_4, window_bounds = array<i64: 2, 64, 64>}, {pipeline_mode = #tpu.pipeline_mode<synchronous>, transform_indices = @transform_5, window_bounds = array<i64: 3, 64>}, {pipeline_mode = #tpu.pipeline_mode<synchronous>, transform_indices = @transform_6, window_bounds = array<i64: 64, 2>}, {pipeline_mode = #tpu.pipeline_mode<synchronous>, transform_indices = @transform_7, window_bounds = array<i64: 1, 2>}, {transform_indices = @transform_8, window_bounds = array<i64: 8, 2>}]} {
    %c0 = arith.constant 0 : index
    %c0_0 = arith.constant 0 : index
    %0 = vector.load %arg1[%c0, %c0_0] : memref<8x16xf32, #tpu.memory_space<vmem>>, vector<8x16xf32>
    %c0_1 = arith.constant 0 : index
    %c0_2 = arith.constant 0 : index
    %1 = vector.load %arg2[%c0_1, %c0_2] : memref<8x4xf32, #tpu.memory_space<vmem>>, vector<8x4xf32>
    %c0_3 = arith.constant 0 : index
    %c0_4 = arith.constant 0 : index
    %2 = vector.load %arg6[%c0_3, %c0_4] : memref<3x64xf32, #tpu.memory_space<vmem>>, vector<3x64xf32>
    %c0_5 = arith.constant 0 : index
    %c0_6 = arith.constant 0 : index
    %3 = vector.load %arg3[%c0_5, %c0_6] : memref<16x64xf32, #tpu.memory_space<vmem>>, vector<16x64xf32>
    %cst = arith.constant dense<0.000000e+00> : vector<8x64xf32>
    %4 = tpu.matmul %0, %3, %cst {dimension_numbers = #tpu.dot_dimension_numbers<[1], [0], [0], [1], [0, 0, 1, 1], [], []>} : vector<8x16xf32>, vector<16x64xf32>, vector<8x64xf32> -> vector<8x64xf32>
    %c0_7 = arith.constant 0 : index
    %c0_8 = arith.constant 0 : index
    %5 = vector.load %arg4[%c0_7, %c0_8] : memref<4x64xf32, #tpu.memory_space<vmem>>, vector<4x64xf32>
    %cst_9 = arith.constant dense<0.000000e+00> : vector<8x64xf32>
    %6 = tpu.matmul %1, %5, %cst_9 {dimension_numbers = #tpu.dot_dimension_numbers<[1], [0], [0], [1], [0, 0, 1, 1], [], []>} : vector<8x4xf32>, vector<4x64xf32>, vector<8x64xf32> -> vector<8x64xf32>
    %7 = arith.addf %4, %6 : vector<8x64xf32>
    %8 = vector.extract_strided_slice %2 {offsets = [0, 0], sizes = [1, 64], strides = [1, 1]} : vector<3x64xf32> to vector<1x64xf32>
    %9 = vector.broadcast %8 : vector<1x64xf32> to vector<8x64xf32>
    %10 = arith.addf %7, %9 : vector<8x64xf32>
    %cst_10 = arith.constant 0.000000e+00 : f32
    %11 = vector.broadcast %cst_10 : f32 to vector<8x64xf32>
    %12 = arith.maximumf %10, %11 : vector<8x64xf32>
    %c0_11 = arith.constant 0 : index
    %c0_12 = arith.constant 0 : index
    %c0_13 = arith.constant 0 : index
    %13 = vector.load %arg5[%c0_11, %c0_12, %c0_13] : memref<2x64x64xf32, #tpu.memory_space<vmem>>, vector<1x64x64xf32>
    %14 = vector.shape_cast %13 : vector<1x64x64xf32> to vector<64x64xf32>
    %cst_14 = arith.constant dense<0.000000e+00> : vector<8x64xf32>
    %15 = tpu.matmul %12, %14, %cst_14 {dimension_numbers = #tpu.dot_dimension_numbers<[1], [0], [0], [1], [0, 0, 1, 1], [], []>} : vector<8x64xf32>, vector<64x64xf32>, vector<8x64xf32> -> vector<8x64xf32>
    %16 = vector.extract_strided_slice %2 {offsets = [1, 0], sizes = [1, 64], strides = [1, 1]} : vector<3x64xf32> to vector<1x64xf32>
    %17 = vector.broadcast %16 : vector<1x64xf32> to vector<8x64xf32>
    %18 = arith.addf %15, %17 : vector<8x64xf32>
    %cst_15 = arith.constant 0.000000e+00 : f32
    %19 = vector.broadcast %cst_15 : f32 to vector<8x64xf32>
    %20 = arith.maximumf %18, %19 : vector<8x64xf32>
    %c1 = arith.constant 1 : index
    %c0_16 = arith.constant 0 : index
    %c0_17 = arith.constant 0 : index
    %21 = vector.load %arg5[%c1, %c0_16, %c0_17] : memref<2x64x64xf32, #tpu.memory_space<vmem>>, vector<1x64x64xf32>
    %22 = vector.shape_cast %21 : vector<1x64x64xf32> to vector<64x64xf32>
    %cst_18 = arith.constant dense<0.000000e+00> : vector<8x64xf32>
    %23 = tpu.matmul %20, %22, %cst_18 {dimension_numbers = #tpu.dot_dimension_numbers<[1], [0], [0], [1], [0, 0, 1, 1], [], []>} : vector<8x64xf32>, vector<64x64xf32>, vector<8x64xf32> -> vector<8x64xf32>
    %24 = vector.extract_strided_slice %2 {offsets = [2, 0], sizes = [1, 64], strides = [1, 1]} : vector<3x64xf32> to vector<1x64xf32>
    %25 = vector.broadcast %24 : vector<1x64xf32> to vector<8x64xf32>
    %26 = arith.addf %23, %25 : vector<8x64xf32>
    %cst_19 = arith.constant 0.000000e+00 : f32
    %27 = vector.broadcast %cst_19 : f32 to vector<8x64xf32>
    %28 = arith.maximumf %26, %27 : vector<8x64xf32>
    %c0_20 = arith.constant 0 : index
    %c0_21 = arith.constant 0 : index
    %29 = vector.load %arg7[%c0_20, %c0_21] : memref<64x2xf32, #tpu.memory_space<vmem>>, vector<64x2xf32>
    %cst_22 = arith.constant dense<0.000000e+00> : vector<8x2xf32>
    %30 = tpu.matmul %28, %29, %cst_22 {dimension_numbers = #tpu.dot_dimension_numbers<[1], [0], [0], [1], [0, 0, 1, 1], [], []>} : vector<8x64xf32>, vector<64x2xf32>, vector<8x2xf32> -> vector<8x2xf32>
    %c0_23 = arith.constant 0 : index
    %c0_24 = arith.constant 0 : index
    %31 = vector.load %arg8[%c0_23, %c0_24] : memref<1x2xf32, #tpu.memory_space<vmem>>, vector<1x2xf32>
    %32 = vector.broadcast %31 : vector<1x2xf32> to vector<8x2xf32>
    %33 = arith.addf %30, %32 : vector<8x2xf32>
    %c0_25 = arith.constant 0 : index
    %c0_26 = arith.constant 0 : index
    %34 = vector.load %arg9[%c0_25, %c0_26] : memref<8x2xf32, #tpu.memory_space<vmem>>, vector<8x2xf32>
    tpu.vector_store %arg9[%c0_25, %c0_26], %33 {strides = array<i32>} : memref<8x2xf32, #tpu.memory_space<vmem>>, vector<8x2xf32>,
    return
  }
  func.func @transform_0(%arg0: i32) -> (i32, i32) {
    %c0_i32 = arith.constant 0 : i32
    %c0_i32_0 = arith.constant 0 : i32
    return %arg0, %c0_i32 : i32, i32
  }
  func.func @transform_1(%arg0: i32) -> (i32, i32) {
    %c0_i32 = arith.constant 0 : i32
    %c0_i32_0 = arith.constant 0 : i32
    return %arg0, %c0_i32 : i32, i32
  }
  func.func @transform_2(%arg0: i32) -> (i32, i32) {
    %c0_i32 = arith.constant 0 : i32
    %c0_i32_0 = arith.constant 0 : i32
    %c0_i32_1 = arith.constant 0 : i32
    return %c0_i32, %c0_i32_0 : i32, i32
  }
  func.func @transform_3(%arg0: i32) -> (i32, i32) {
    %c0_i32 = arith.constant 0 : i32
    %c0_i32_0 = arith.constant 0 : i32
    %c0_i32_1 = arith.constant 0 : i32
    return %c0_i32, %c0_i32_0 : i32, i32
  }
  func.func @transform_4(%arg0: i32) -> (i32, i32, i32) {
    %c0_i32 = arith.constant 0 : i32
    %c0_i32_0 = arith.constant 0 : i32
    %c0_i32_1 = arith.constant 0 : i32
    %c0_i32_2 = arith.constant 0 : i32
    return %c0_i32, %c0_i32_0, %c0_i32_1 : i32, i32, i32
  }
  func.func @transform_5(%arg0: i32) -> (i32, i32) {
    %c0_i32 = arith.constant 0 : i32
    %c0_i32_0 = arith.constant 0 : i32
    %c0_i32_1 = arith.constant 0 : i32
    return %c0_i32, %c0_i32_0 : i32, i32
  }
  func.func @transform_6(%arg0: i32) -> (i32, i32) {
    %c0_i32 = arith.constant 0 : i32
    %c0_i32_0 = arith.constant 0 : i32
    %c0_i32_1 = arith.constant 0 : i32
    return %c0_i32, %c0_i32_0 : i32, i32
  }
  func.func @transform_7(%arg0: i32) -> (i32, i32) {
    %c0_i32 = arith.constant 0 : i32
    %c0_i32_0 = arith.constant 0 : i32
    %c0_i32_1 = arith.constant 0 : i32
    return %c0_i32, %c0_i32_0 : i32, i32
  }
  func.func @transform_8(%arg0: i32) -> (i32, i32) {
    %c0_i32 = arith.constant 0 : i32
    %c0_i32_0 = arith.constant 0 : i32
    return %arg0, %c0_i32 : i32, i32
  }
}

</mosaic_0001>

<llo_original>
// kernel: tpu_custom_call.1
$region0: #{tpu_custom_call.1}
  #allocation0 [shape = 'u32[]', space=smem, size = 0x4, offset = 0x4, fixed_abs, tag = 'smem constant byte address 0x4 - core index']
  #allocation1 [shape = 'u32[144,128]{1,0:T(1,128)}', space=vmem, size = 0x12000, scoped, tag = 'internal scratch']
  %s0 = inlined_call_operand.vmem [shape: f32[8,16], index: 0, kind: input, shape index: {}]
  %s1 = inlined_call_operand.vmem [shape: f32[8,4], index: 1, kind: input, shape index: {}]
  %s2 = inlined_call_operand.vmem [shape: f32[16,64], index: 2, kind: input, shape index: {}]
  %s3 = inlined_call_operand.vmem [shape: f32[4,64], index: 3, kind: input, shape index: {}]
  %s4 = inlined_call_operand.hbm [shape: f32[2,64,64], index: 4, kind: input, shape index: {}]
  %s5 = inlined_call_operand.vmem [shape: f32[3,64], index: 5, kind: input, shape index: {}]
  %s6 = inlined_call_operand.vmem [shape: f32[64,2], index: 6, kind: input, shape index: {}]
  %s7 = inlined_call_operand.vmem [shape: f32[1,2], index: 7, kind: input, shape index: {}]
  %s8 = inlined_call_operand.vmem [shape: f32[8,2], index: 8, kind: output, shape index: {}]
  %s9 = sld [smem:[#allocation0]]
  $region46: #{tpu_custom_call.1} parent=0
    _
  %s11 = ssub.s32 1, %s9
  %s12 = scalar_select 0, %s11, %s9
  $region1: #{tpu_custom_call.1} parent=0
    #allocation2 [shape = 'u8[65536]{0}', space=vmem, size = 0x10000, scoped, tag = 'input window, operand 4, single buffered']
    #allocation3 [shape = 's32[1]{0}', space=sflag, size = 0x4, scoped, tag = 'scoped memory for tpu_custom_call.1']
    %13 = vsyncpa [#allocation3], 0
    // Predicated region
    $region2: #{tpu_custom_call.1} parent=1 // pred_check
      _
    $region3: #{tpu_custom_call.1} parent=1 // pred_check_branch
      %15 = sbr.rel (0) target = $region5
    $region4: #{tpu_custom_call.1} parent=1 // pred_region
      _
    $region5: #{tpu_custom_call.1} parent=1 // pred_fallthru
      _
    // Predicated region
    $region6: #{tpu_custom_call.1} parent=1 // pred_check
      _
    $region7: #{tpu_custom_call.1} parent=1 // pred_check_branch
      %17 = sbr.rel (0) target = $region9
    $region8: #{tpu_custom_call.1} parent=1 // pred_region
      _
    $region9: #{tpu_custom_call.1} parent=1 // pred_fallthru
      _
    // Predicated region
    $region10: #{tpu_custom_call.1} parent=1 // pred_check
      _
    $region11: #{tpu_custom_call.1} parent=1 // pred_check_branch
      %19 = sbr.rel (0) target = $region13
    $region12: #{tpu_custom_call.1} parent=1 // pred_region
      _
    $region13: #{tpu_custom_call.1} parent=1 // pred_fallthru
      _
    // Predicated region
    $region14: #{tpu_custom_call.1} parent=1 // pred_check
      _
    $region15: #{tpu_custom_call.1} parent=1 // pred_check_branch
      %21 = sbr.rel (0) target = $region17
    $region16: #{tpu_custom_call.1} parent=1 // pred_region
      _
    $region17: #{tpu_custom_call.1} parent=1 // pred_fallthru
      _
    // Predicated region
    $region18: #{tpu_custom_call.1} parent=1 // pred_check
      _
    $region19: #{tpu_custom_call.1} parent=1 // pred_check_branch
      %23 = sbr.rel (0) target = $region21
    $region20: #{tpu_custom_call.1} parent=1 // pred_region
      %s25 = ssub.s32 2048, 2048
      %26 = vsyncadd [#allocation3], %s25
      %s27 = sshll.u32 [#allocation2], 4
      %s28 = int_to_ptr.vmem [resolvable:$true] %s27
      %33 = dma.hbm_to_vmem [thread:$0]  %s4, 2048, %s28, [#allocation3], 128, 128, 8
    $region21: #{tpu_custom_call.1} parent=1 // pred_fallthru
      _
    // Predicated region
    $region22: #{tpu_custom_call.1} parent=1 // pred_check
      _
    $region23: #{tpu_custom_call.1} parent=1 // pred_check_branch
      %35 = sbr.rel (0) target = $region25
    $region24: #{tpu_custom_call.1} parent=1 // pred_region
      _
    $region25: #{tpu_custom_call.1} parent=1 // pred_fallthru
      _
    // Predicated region
    $region26: #{tpu_custom_call.1} parent=1 // pred_check
      _
    $region27: #{tpu_custom_call.1} parent=1 // pred_check_branch
      %37 = sbr.rel (0) target = $region29
    $region28: #{tpu_custom_call.1} parent=1 // pred_region
      _
    $region29: #{tpu_custom_call.1} parent=1 // pred_fallthru
      _
    // Predicated region
    $region30: #{tpu_custom_call.1} parent=1 // pred_check
      _
    $region31: #{tpu_custom_call.1} parent=1 // pred_check_branch
      %39 = sbr.rel (0) target = $region33
    $region32: #{tpu_custom_call.1} parent=1 // pred_region
      _
    $region33: #{tpu_custom_call.1} parent=1 // pred_fallthru
      _
    // Predicated region
    $region34: #{tpu_custom_call.1} parent=1 // pred_check
      _
    $region35: #{tpu_custom_call.1} parent=1 // pred_check_branch
      %41 = sbr.rel (0) target = $region37
    $region36: #{tpu_custom_call.1} parent=1 // pred_region
      %42 = dma.done [#allocation3], 2048
    $region37: #{tpu_custom_call.1} parent=1 // pred_fallthru
      _
    %v43 = vld [vmem:[%s0] sm:$0xff]
    %v44 = vld [vmem:[%s1] sm:$0xff]
    %v45 = vld [vmem:[%s5] sm:$0x7]
    %v46 = vld [vmem:[%s2] sm:$0xff]
    %v47 = vld [vmem:[%s2 + $0x8] sm:$0xff]
    %v48 = vld [vmem:[%s3] sm:$0xf]
    %vm49 = vcmask 31744
    %v51 = vsel %vm49, %v44, 0
    %vm53 = vcmask 1043456
    %v55 = vsel %vm53, %v48, 0
    %57 = vmatprep.subr.mxu0 0.0
    %58 = vmatpush1.msra.mxu0 %v55
    %59 = vmatprep.subr.mxu0 0.0
    %60 = vmatpush1.msra.mxu0 0.0
    %61 = vmatprep.subr.mxu0 0.0
    %62 = vmatpush1.msra.mxu0 0.0
    %63 = vmatprep.subr.mxu0 0.0
    %64 = vmatpush1.msra.mxu0 0.0
    %65 = vmatprep.subr.mxu0 0.0
    %66 = vmatpush1.msra.mxu0 0.0
    %67 = vmatprep.subr.mxu0 0.0
    %68 = vmatpush1.msra.mxu0 0.0
    %69 = vmatprep.subr.mxu0 0.0
    %70 = vmatpush1.msra.mxu0 0.0
    %71 = vmatprep.subr.mxu0 0.0
    %72 = vmatpush1.msra.mxu0 0.0
    %73 = vmatprep.subr.mxu0 0.0
    %74 = vmatpush1.msra.mxu0 0.0
    %75 = vmatprep.subr.mxu0 0.0
    %76 = vmatpush1.msra.mxu0 0.0
    %77 = vmatprep.subr.mxu0 0.0
    %78 = vmatpush1.msra.mxu0 0.0
    %79 = vmatprep.subr.mxu0 0.0
    %80 = vmatpush1.msra.mxu0 0.0
    %81 = vmatprep.subr.mxu0 0.0
    %82 = vmatpush1.msra.mxu0 0.0
    %83 = vmatprep.subr.mxu0 0.0
    %84 = vmatpush1.msra.mxu0 0.0
    %85 = vmatprep.subr.mxu0 0.0
    %86 = vmatpush1.msra.mxu0 0.0
    %87 = vmatprep.subr.mxu0 0.0
    %88 = vmatpush1.msra.mxu0 0.0
    %89 = vmatprep.subr.mxu0 0.0
    %90 = vmatpush1.msra.mxu0 0.0
    %91 = vmatprep.subr.mxu0 0.0
    %92 = vmatpush1.msra.mxu0 0.0
    %93 = vmatprep.subr.mxu0 0.0
    %94 = vmatpush1.msra.mxu0 0.0
    %95 = vmatprep.subr.mxu0 0.0
    %96 = vmatpush1.msra.mxu0 0.0
    %97 = vmatprep.subr.mxu0 0.0
    %98 = vmatpush1.msra.mxu0 0.0
    %99 = vmatprep.subr.mxu0 0.0
    %100 = vmatpush1.msra.mxu0 0.0
    %101 = vmatprep.subr.mxu0 0.0
    %102 = vmatpush1.msra.mxu0 0.0
    %103 = vmatprep.subr.mxu0 0.0
    %104 = vmatpush1.msra.mxu0 0.0
    %105 = vmatprep.subr.mxu0 0.0
    %106 = vmatpush1.msra.mxu0 0.0
    %107 = vmatprep.subr.mxu0 0.0
    %108 = vmatpush1.msra.mxu0 0.0
    %109 = vmatprep.subr.mxu0 0.0
    %110 = vmatpush1.msra.mxu0 0.0
    %111 = vmatprep.subr.mxu0 0.0
    %112 = vmatpush1.msra.mxu0 0.0
    %113 = vmatprep.subr.mxu0 0.0
    %114 = vmatpush1.msra.mxu0 0.0
    %115 = vmatprep.subr.mxu0 0.0
    %116 = vmatpush1.msra.mxu0 0.0
    %117 = vmatprep.subr.mxu0 0.0
    %118 = vmatpush1.msra.mxu0 0.0
    %119 = vmatprep.subr.mxu0 0.0
    %120 = vmatpush1.msra.mxu0 0.0
    %121 = vmatprep.mubr.f32.mxu0 0.0
    %122 = vmatmul.mubr.f32.gmra.mrb[0].mxu0 %v51
    %v123 = vpop.f32.mrb[0].mxu0
    %v124 = vadd.f32 0.0, %v123
    %v125 = vpop.f32.mrb[0].mxu0
    %126 = vdwg.mxu0
    %vm127 = vcmask 130048
    %v129 = vsel %vm127, %v43, 0
    %131 = vmatprep.subr.mxu0 0.0
    %132 = vmatpush1.msra.mxu0 %v46
    %133 = vmatprep.subr.mxu0 0.0
    %134 = vmatpush1.msra.mxu0 %v47
    %135 = vmatprep.subr.mxu0 0.0
    %136 = vmatpush1.msra.mxu0 0.0
    %137 = vmatprep.subr.mxu0 0.0
    %138 = vmatpush1.msra.mxu0 0.0
    %139 = vmatprep.subr.mxu0 0.0
    %140 = vmatpush1.msra.mxu0 0.0
    %141 = vmatprep.subr.mxu0 0.0
    %142 = vmatpush1.msra.mxu0 0.0
    %143 = vmatprep.subr.mxu0 0.0
    %144 = vmatpush1.msra.mxu0 0.0
    %145 = vmatprep.subr.mxu0 0.0
    %146 = vmatpush1.msra.mxu0 0.0
    %147 = vmatprep.subr.mxu0 0.0
    %148 = vmatpush1.msra.mxu0 0.0
    %149 = vmatprep.subr.mxu0 0.0
    %150 = vmatpush1.msra.mxu0 0.0
    %151 = vmatprep.subr.mxu0 0.0
    %152 = vmatpush1.msra.mxu0 0.0
    %153 = vmatprep.subr.mxu0 0.0
    %154 = vmatpush1.msra.mxu0 0.0
    %155 = vmatprep.subr.mxu0 0.0
    %156 = vmatpush1.msra.mxu0 0.0
    %157 = vmatprep.subr.mxu0 0.0
    %158 = vmatpush1.msra.mxu0 0.0
    %159 = vmatprep.subr.mxu0 0.0
    %160 = vmatpush1.msra.mxu0 0.0
    %161 = vmatprep.subr.mxu0 0.0
    %162 = vmatpush1.msra.mxu0 0.0
    %163 = vmatprep.subr.mxu0 0.0
    %164 = vmatpush1.msra.mxu0 0.0
    %165 = vmatprep.subr.mxu0 0.0
    %166 = vmatpush1.msra.mxu0 0.0
    %167 = vmatprep.subr.mxu0 0.0
    %168 = vmatpush1.msra.mxu0 0.0
    %169 = vmatprep.subr.mxu0 0.0
    %170 = vmatpush1.msra.mxu0 0.0
    %171 = vmatprep.subr.mxu0 0.0
    %172 = vmatpush1.msra.mxu0 0.0
    %173 = vmatprep.subr.mxu0 0.0
    %174 = vmatpush1.msra.mxu0 0.0
    %175 = vmatprep.subr.mxu0 0.0
    %176 = vmatpush1.msra.mxu0 0.0
    %177 = vmatprep.subr.mxu0 0.0
    %178 = vmatpush1.msra.mxu0 0.0
    %179 = vmatprep.subr.mxu0 0.0
    %180 = vmatpush1.msra.mxu0 0.0
    %181 = vmatprep.subr.mxu0 0.0
    %182 = vmatpush1.msra.mxu0 0.0
    %183 = vmatprep.subr.mxu0 0.0
    %184 = vmatpush1.msra.mxu0 0.0
    %185 = vmatprep.subr.mxu0 0.0
    %186 = vmatpush1.msra.mxu0 0.0
    %187 = vmatprep.subr.mxu0 0.0
    %188 = vmatpush1.msra.mxu0 0.0
    %189 = vmatprep.subr.mxu0 0.0
    %190 = vmatpush1.msra.mxu0 0.0
    %191 = vmatprep.subr.mxu0 0.0
    %192 = vmatpush1.msra.mxu0 0.0
    %193 = vmatprep.subr.mxu0 0.0
    %194 = vmatpush1.msra.mxu0 0.0
    %195 = vmatprep.mubr.f32.mxu0 0.0
    %196 = vmatmul.mubr.f32.gmra.mrb[0].mxu0 %v129
    %v197 = vpop.f32.mrb[0].mxu0
    %v198 = vadd.f32 %v124, %v197
    %v199 = vpop.f32.mrb[0].mxu0
    %200 = vdwg.mxu0
    %v201 = vlaneseq
    %v202 = vshrl.u32 %v201, 7
    %v203 = vsub.s32 0, %v202
    %v204 = vrot.slane %v45, %v203
    %v205 = vadd.f32 %v198, %v204
    %v206 = vmax.f32 %v205, 0.0
    %v207 = vld [vmem:[#allocation2] sm:$0xff]
    %v208 = vld [vmem:[#allocation2 + $0x8] sm:$0xff]
    %v209 = vld [vmem:[#allocation2 + $0x10] sm:$0xff]
    %v210 = vld [vmem:[#allocation2 + $0x18] sm:$0xff]
    %v211 = vld [vmem:[#allocation2 + $0x20] sm:$0xff]
    %v212 = vld [vmem:[#allocation2 + $0x28] sm:$0xff]
    %v213 = vld [vmem:[#allocation2 + $0x30] sm:$0xff]
    %v214 = vld [vmem:[#allocation2 + $0x38] sm:$0xff]
    %v215 = vlaneseq
    %v216 = vshrl.u32 %v215, 7
    %v217 = vsub.s32 1, %v216
    %v218 = vrot.slane %v45, %v217
    %vm219 = vcmask 523264
    %v221 = vsel %vm219, %v206, 0
    %223 = vmatprep.subr.mxu0 0.0
    %224 = vmatpush1.msra.mxu0 %v207
    %225 = vmatprep.subr.mxu0 0.0
    %226 = vmatpush1.msra.mxu0 %v208
    %227 = vmatprep.subr.mxu0 0.0
    %228 = vmatpush1.msra.mxu0 %v209
    %229 = vmatprep.subr.mxu0 0.0
    %230 = vmatpush1.msra.mxu0 %v210
    %231 = vmatprep.subr.mxu0 0.0
    %232 = vmatpush1.msra.mxu0 %v211
    %233 = vmatprep.subr.mxu0 0.0
    %234 = vmatpush1.msra.mxu0 %v212
    %235 = vmatprep.subr.mxu0 0.0
    %236 = vmatpush1.msra.mxu0 %v213
    %237 = vmatprep.subr.mxu0 0.0
    %238 = vmatpush1.msra.mxu0 %v214
    %239 = vmatprep.subr.mxu0 0.0
    %240 = vmatpush1.msra.mxu0 0.0
    %241 = vmatprep.subr.mxu0 0.0
    %242 = vmatpush1.msra.mxu0 0.0
    %243 = vmatprep.subr.mxu0 0.0
    %244 = vmatpush1.msra.mxu0 0.0
    %245 = vmatprep.subr.mxu0 0.0
    %246 = vmatpush1.msra.mxu0 0.0
    %247 = vmatprep.subr.mxu0 0.0
    %248 = vmatpush1.msra.mxu0 0.0
    %249 = vmatprep.subr.mxu0 0.0
    %250 = vmatpush1.msra.mxu0 0.0
    %251 = vmatprep.subr.mxu0 0.0
    %252 = vmatpush1.msra.mxu0 0.0
    %253 = vmatprep.subr.mxu0 0.0
    %254 = vmatpush1.msra.mxu0 0.0
    %255 = vmatprep.subr.mxu0 0.0
    %256 = vmatpush1.msra.mxu0 0.0
    %257 = vmatprep.subr.mxu0 0.0
    %258 = vmatpush1.msra.mxu0 0.0
    %259 = vmatprep.subr.mxu0 0.0
    %260 = vmatpush1.msra.mxu0 0.0
    %261 = vmatprep.subr.mxu0 0.0
    %262 = vmatpush1.msra.mxu0 0.0
    %263 = vmatprep.subr.mxu0 0.0
    %264 = vmatpush1.msra.mxu0 0.0
    %265 = vmatprep.subr.mxu0 0.0
    %266 = vmatpush1.msra.mxu0 0.0
    %267 = vmatprep.subr.mxu0 0.0
    %268 = vmatpush1.msra.mxu0 0.0
    %269 = vmatprep.subr.mxu0 0.0
    %270 = vmatpush1.msra.mxu0 0.0
    %271 = vmatprep.subr.mxu0 0.0
    %272 = vmatpush1.msra.mxu0 0.0
    %273 = vmatprep.subr.mxu0 0.0
    %274 = vmatpush1.msra.mxu0 0.0
    %275 = vmatprep.subr.mxu0 0.0
    %276 = vmatpush1.msra.mxu0 0.0
    %277 = vmatprep.subr.mxu0 0.0
    %278 = vmatpush1.msra.mxu0 0.0
    %279 = vmatprep.subr.mxu0 0.0
    %280 = vmatpush1.msra.mxu0 0.0
    %281 = vmatprep.subr.mxu0 0.0
    %282 = vmatpush1.msra.mxu0 0.0
    %283 = vmatprep.subr.mxu0 0.0
    %284 = vmatpush1.msra.mxu0 0.0
    %285 = vmatprep.subr.mxu0 0.0
    %286 = vmatpush1.msra.mxu0 0.0
    %287 = vmatprep.mubr.f32.mxu0 0.0
    %288 = vmatmul.mubr.f32.gmra.mrb[0].mxu0 %v221
    %v289 = vpop.f32.mrb[0].mxu0
    %v290 = vadd.f32 %v218, %v289
    %v291 = vpop.f32.mrb[0].mxu0
    %292 = vdwg.mxu0
    %v293 = vmax.f32 %v290, 0.0
    %s294 = scalar_lea.vmem [#allocation2], 64
    %v295 = vld [vmem:[%s294] sm:$0xff]
    %v296 = vld [vmem:[%s294 + $0x8] sm:$0xff]
    %v297 = vld [vmem:[%s294 + $0x10] sm:$0xff]
    %v298 = vld [vmem:[%s294 + $0x18] sm:$0xff]
    %v299 = vld [vmem:[%s294 + $0x20] sm:$0xff]
    %v300 = vld [vmem:[%s294 + $0x28] sm:$0xff]
    %v301 = vld [vmem:[%s294 + $0x30] sm:$0xff]
    %v302 = vld [vmem:[%s294 + $0x38] sm:$0xff]
    %v303 = vlaneseq
    %v304 = vshrl.u32 %v303, 7
    %v305 = vsub.s32 2, %v304
    %v306 = vrot.slane %v45, %v305
    %v308 = vsel %vm219, %v293, 0
    %310 = vmatprep.subr.mxu0 0.0
    %311 = vmatpush1.msra.mxu0 %v295
    %312 = vmatprep.subr.mxu0 0.0
    %313 = vmatpush1.msra.mxu0 %v296
    %314 = vmatprep.subr.mxu0 0.0
    %315 = vmatpush1.msra.mxu0 %v297
    %316 = vmatprep.subr.mxu0 0.0
    %317 = vmatpush1.msra.mxu0 %v298
    %318 = vmatprep.subr.mxu0 0.0
    %319 = vmatpush1.msra.mxu0 %v299
    %320 = vmatprep.subr.mxu0 0.0
    %321 = vmatpush1.msra.mxu0 %v300
    %322 = vmatprep.subr.mxu0 0.0
    %323 = vmatpush1.msra.mxu0 %v301
    %324 = vmatprep.subr.mxu0 0.0
    %325 = vmatpush1.msra.mxu0 %v302
    %326 = vmatprep.subr.mxu0 0.0
    %327 = vmatpush1.msra.mxu0 0.0
    %328 = vmatprep.subr.mxu0 0.0
    %329 = vmatpush1.msra.mxu0 0.0
    %330 = vmatprep.subr.mxu0 0.0
    %331 = vmatpush1.msra.mxu0 0.0
    %332 = vmatprep.subr.mxu0 0.0
    %333 = vmatpush1.msra.mxu0 0.0
    %334 = vmatprep.subr.mxu0 0.0
    %335 = vmatpush1.msra.mxu0 0.0
    %336 = vmatprep.subr.mxu0 0.0
    %337 = vmatpush1.msra.mxu0 0.0
    %338 = vmatprep.subr.mxu0 0.0
    %339 = vmatpush1.msra.mxu0 0.0
    %340 = vmatprep.subr.mxu0 0.0
    %341 = vmatpush1.msra.mxu0 0.0
    %342 = vmatprep.subr.mxu0 0.0
    %343 = vmatpush1.msra.mxu0 0.0
    %344 = vmatprep.subr.mxu0 0.0
    %345 = vmatpush1.msra.mxu0 0.0
    %346 = vmatprep.subr.mxu0 0.0
    %347 = vmatpush1.msra.mxu0 0.0
    %348 = vmatprep.subr.mxu0 0.0
    %349 = vmatpush1.msra.mxu0 0.0
    %350 = vmatprep.subr.mxu0 0.0
    %351 = vmatpush1.msra.mxu0 0.0
    %352 = vmatprep.subr.mxu0 0.0
    %353 = vmatpush1.msra.mxu0 0.0
    %354 = vmatprep.subr.mxu0 0.0
    %355 = vmatpush1.msra.mxu0 0.0
    %356 = vmatprep.subr.mxu0 0.0
    %357 = vmatpush1.msra.mxu0 0.0
    %358 = vmatprep.subr.mxu0 0.0
    %359 = vmatpush1.msra.mxu0 0.0
    %360 = vmatprep.subr.mxu0 0.0
    %361 = vmatpush1.msra.mxu0 0.0
    %362 = vmatprep.subr.mxu0 0.0
    %363 = vmatpush1.msra.mxu0 0.0
    %364 = vmatprep.subr.mxu0 0.0
    %365 = vmatpush1.msra.mxu0 0.0
    %366 = vmatprep.subr.mxu0 0.0
    %367 = vmatpush1.msra.mxu0 0.0
    %368 = vmatprep.subr.mxu0 0.0
    %369 = vmatpush1.msra.mxu0 0.0
    %370 = vmatprep.subr.mxu0 0.0
    %371 = vmatpush1.msra.mxu0 0.0
    %372 = vmatprep.subr.mxu0 0.0
    %373 = vmatpush1.msra.mxu0 0.0
    %374 = vmatprep.mubr.f32.mxu0 0.0
    %375 = vmatmul.mubr.f32.gmra.mrb[0].mxu0 %v308
    %v376 = vpop.f32.mrb[0].mxu0
    %v377 = vadd.f32 %v306, %v376
    %v378 = vpop.f32.mrb[0].mxu0
    %379 = vdwg.mxu0
    %v380 = vmax.f32 %v377, 0.0
    %v381 = vld [vmem:[%s6] sm:$0xff]
    %v382 = vld [vmem:[%s6 + $0x8] sm:$0xff]
    %v383 = vld [vmem:[%s6 + $0x10] sm:$0xff]
    %v384 = vld [vmem:[%s6 + $0x18] sm:$0xff]
    %v385 = vld [vmem:[%s6 + $0x20] sm:$0xff]
    %v386 = vld [vmem:[%s6 + $0x28] sm:$0xff]
    %v387 = vld [vmem:[%s6 + $0x30] sm:$0xff]
    %v388 = vld [vmem:[%s6 + $0x38] sm:$0xff]
    %v389 = vld [vmem:[%s7] sm:$0x1]
    %v391 = vlaneseq
    %v392 = vshrl.u32 %v391, 7
    %v393 = vsub.s32 0, %v392
    %v394 = vrot.slane %v389, %v393
    %v397 = vsel %vm219, %v380, 0
    %399 = vmatprep.subr.mxu0 0.0
    %400 = vmatpush1.msra.mxu0 %v381
    %401 = vmatprep.subr.mxu0 0.0
    %402 = vmatpush1.msra.mxu0 %v382
    %403 = vmatprep.subr.mxu0 0.0
    %404 = vmatpush1.msra.mxu0 %v383
    %405 = vmatprep.subr.mxu0 0.0
    %406 = vmatpush1.msra.mxu0 %v384
    %407 = vmatprep.subr.mxu0 0.0
    %408 = vmatpush1.msra.mxu0 %v385
    %409 = vmatprep.subr.mxu0 0.0
    %410 = vmatpush1.msra.mxu0 %v386
    %411 = vmatprep.subr.mxu0 0.0
    %412 = vmatpush1.msra.mxu0 %v387
    %413 = vmatprep.subr.mxu0 0.0
    %414 = vmatpush1.msra.mxu0 %v388
    %415 = vmatprep.subr.mxu0 0.0
    %416 = vmatpush1.msra.mxu0 0.0
    %417 = vmatprep.subr.mxu0 0.0
    %418 = vmatpush1.msra.mxu0 0.0
    %419 = vmatprep.subr.mxu0 0.0
    %420 = vmatpush1.msra.mxu0 0.0
    %421 = vmatprep.subr.mxu0 0.0
    %422 = vmatpush1.msra.mxu0 0.0
    %423 = vmatprep.subr.mxu0 0.0
    %424 = vmatpush1.msra.mxu0 0.0
    %425 = vmatprep.subr.mxu0 0.0
    %426 = vmatpush1.msra.mxu0 0.0
    %427 = vmatprep.subr.mxu0 0.0
    %428 = vmatpush1.msra.mxu0 0.0
    %429 = vmatprep.subr.mxu0 0.0
    %430 = vmatpush1.msra.mxu0 0.0
    %431 = vmatprep.subr.mxu0 0.0
    %432 = vmatpush1.msra.mxu0 0.0
    %433 = vmatprep.subr.mxu0 0.0
    %434 = vmatpush1.msra.mxu0 0.0
    %435 = vmatprep.subr.mxu0 0.0
    %436 = vmatpush1.msra.mxu0 0.0
    %437 = vmatprep.subr.mxu0 0.0
    %438 = vmatpush1.msra.mxu0 0.0
    %439 = vmatprep.subr.mxu0 0.0
    %440 = vmatpush1.msra.mxu0 0.0
    %441 = vmatprep.subr.mxu0 0.0
    %442 = vmatpush1.msra.mxu0 0.0
    %443 = vmatprep.subr.mxu0 0.0
    %444 = vmatpush1.msra.mxu0 0.0
    %445 = vmatprep.subr.mxu0 0.0
    %446 = vmatpush1.msra.mxu0 0.0
    %447 = vmatprep.subr.mxu0 0.0
    %448 = vmatpush1.msra.mxu0 0.0
    %449 = vmatprep.subr.mxu0 0.0
    %450 = vmatpush1.msra.mxu0 0.0
    %451 = vmatprep.subr.mxu0 0.0
    %452 = vmatpush1.msra.mxu0 0.0
    %453 = vmatprep.subr.mxu0 0.0
    %454 = vmatpush1.msra.mxu0 0.0
    %455 = vmatprep.subr.mxu0 0.0
    %456 = vmatpush1.msra.mxu0 0.0
    %457 = vmatprep.subr.mxu0 0.0
    %458 = vmatpush1.msra.mxu0 0.0
    %459 = vmatprep.subr.mxu0 0.0
    %460 = vmatpush1.msra.mxu0 0.0
    %461 = vmatprep.subr.mxu0 0.0
    %462 = vmatpush1.msra.mxu0 0.0
    %463 = vmatprep.mubr.f32.mxu0 0.0
    %464 = vmatmul.mubr.f32.gmra.mrb[0].mxu0 %v397
    %v465 = vpop.f32.mrb[0].mxu0
    %v466 = vadd.f32 %v394, %v465
    %v467 = vpop.f32.mrb[0].mxu0
    %468 = vdwg.mxu0
    %vm469 = vcmask 15360
    %470 = vst.msk [vmem:[%s8] sm:$0xff] %vm469, %v466
    // Predicated region
    $region38: #{tpu_custom_call.1} parent=1 // pred_check
      _
    $region39: #{tpu_custom_call.1} parent=1 // pred_check_branch
      %472 = sbr.rel (0) target = $region41
    $region40: #{tpu_custom_call.1} parent=1 // pred_region
      _
    $region41: #{tpu_custom_call.1} parent=1 // pred_fallthru
      _
    // Predicated region
    $region42: #{tpu_custom_call.1} parent=1 // pred_check
      _
    $region43: #{tpu_custom_call.1} parent=1 // pred_check_branch
      %474 = sbr.rel (0) target = $region45
    $region44: #{tpu_custom_call.1} parent=1 // pred_region
      _
    $region45: #{tpu_custom_call.1} parent=1 // pred_fallthru
      _
    %475 = vsyncpa [#allocation3], 1

</llo_original>
